<compile_context>
chip_gen: v7x
topology: tpu7x:2x2x1
jax: 0.10.0
libtpu: 0.0.40
codegen_flags: <defaults>
</compile_context>

<pallas_src>
import jax
import jax.numpy as jnp
from jax.experimental import pallas as pl
from jax.experimental.pallas import tpu as pltpu


def _norm_kernel(scale_ref, bias_ref, img_ref, out_ref):
    # scale_ref / bias_ref: (BR, 1) f32 per-row (= per-channel) constants
    # img_ref / out_ref:    (BR, BL) lane-dense tile
    x = img_ref[...]
    out_ref[...] = (x * scale_ref[...] + bias_ref[...]).astype(out_ref.dtype)


def _choose_blocks(rows, cols, itemsize, target_bytes=2 << 20, hard_cap=6 << 20):
    """Pick (block_rows, block_cols) that respect the (8, 128) tiling rules."""
    row_bytes = cols * itemsize
    if rows < 8:
        br = rows                                   # full-dim exemption
    else:
        want = max(1, target_bytes // max(row_bytes, 1))
        br = min(rows, int(want))
        br = max(8, (br // 8) * 8)                  # multiple of 8 sublanes
    if br * row_bytes <= hard_cap or cols % 128 != 0:
        bl = cols                                   # full row (lane-dense / exempt)
    else:
        bl = max(128, int((target_bytes // (br * itemsize)) // 128) * 128)
        bl = min(cols, bl)                          # multiple of 128 lanes
    return br, bl


def normalization(image: jax.Array, mean: jax.Array, std: jax.Array) -> jax.Array:
    """(image - mean[:, None, None]) / std[:, None, None], image in NCHW."""
    N, C, H, W = image.shape
    R, L = N * C, H * W

    # Fold (x - m) / s into x * scale + bias; keep constants in f32.
    scale_c = 1.0 / std.astype(jnp.float32).reshape(C)
    bias_c = -mean.astype(jnp.float32).reshape(C) * scale_c
    scale = jnp.tile(scale_c, (N,)).reshape(R, 1)
    bias = jnp.tile(bias_c, (N,)).reshape(R, 1)

    x2d = image.reshape(R, L)                       # zero-copy for contiguous NCHW
    br, bl = _choose_blocks(R, L, jnp.dtype(image.dtype).itemsize)
    grid = (pl.cdiv(R, br), pl.cdiv(L, bl))

    out2d = pl.pallas_call(
        _norm_kernel,
        out_shape=jax.ShapeDtypeStruct((R, L), image.dtype),
        grid=grid,
        in_specs=[
            pl.BlockSpec((br, 1), lambda i, j: (i, 0)),   # scale rows
            pl.BlockSpec((br, 1), lambda i, j: (i, 0)),   # bias rows
            pl.BlockSpec((br, bl), lambda i, j: (i, j)),  # image tile
        ],
        out_specs=pl.BlockSpec((br, bl), lambda i, j: (i, j)),
        compiler_params=pltpu.CompilerParams(
            dimension_semantics=("parallel", "parallel"),
            vmem_limit_bytes=32 * 1024 * 1024,
        ),
    )(scale, bias, x2d)
    return out2d.reshape(N, C, H, W)


def _reference(image, mean, std):
    C = mean.shape[0]
    return (image - mean.reshape(1, C, 1, 1)) / std.reshape(1, C, 1, 1)


if __name__ == "__main__":
    key = jax.random.PRNGKey(0)

    # Torchvision-style per-channel normalization constants.
    mean = jnp.array([0.485, 0.456, 0.406], dtype=jnp.float32)
    std = jnp.array([0.229, 0.224, 0.225], dtype=jnp.float32)

    # Small NCHW input consistent with the module's forward.
    N, C, H, W = 2, 3, 16, 16
    image = jax.random.uniform(key, (N, C, H, W), dtype=jnp.float32)

    out = jax.block_until_ready(normalization(image, mean, std))
    ref = _reference(image, mean, std)
    assert out.shape == (N, C, H, W)
    assert jnp.allclose(out, ref, rtol=1e-5, atol=1e-6)

    # Secondary check: exercises multi-step grid with a partial final row block.
    key2 = jax.random.PRNGKey(1)
    N2, C2, H2, W2 = 5, 4, 32, 128
    mean2 = jnp.arange(1, C2 + 1, dtype=jnp.float32) * 0.1
    std2 = jnp.arange(1, C2 + 1, dtype=jnp.float32) * 0.25
    image2 = jax.random.normal(key2, (N2, C2, H2, W2), dtype=jnp.float32)
    out2 = jax.block_until_ready(normalization(image2, mean2, std2))
    ref2 = _reference(image2, mean2, std2)
    assert jnp.allclose(out2, ref2, rtol=1e-5, atol=1e-6)

    print("KERNEL_OK")
</pallas_src>

<mosaic_0001>
module attributes {stable_mosaic.version = 11 : i64} {
  func.func @_norm_kernel(%arg0: i32, %arg1: i32, %arg2: memref<6x1xf32, #tpu.memory_space<vmem>>, %arg3: memref<6x1xf32, #tpu.memory_space<vmem>>, %arg4: memref<6x256xf32, #tpu.memory_space<vmem>>, %arg5: memref<6x256xf32, #tpu.memory_space<vmem>>) attributes {dimension_semantics = [#tpu.dimension_semantics<parallel>, #tpu.dimension_semantics<parallel>], iteration_bounds = array<i64: 1, 1>, scalar_prefetch = 0 : i64, scratch_operands = 0 : i64, tpu.core_type = #tpu.core_type<tc>, window_params = [{transform_indices = @transform_0, window_bounds = array<i64: 6, 1>}, {transform_indices = @transform_1, window_bounds = array<i64: 6, 1>}, {transform_indices = @transform_2, window_bounds = array<i64: 6, 256>}, {transform_indices = @transform_3, window_bounds = array<i64: 6, 256>}]} {
    %c0 = arith.constant 0 : index
    %c0_0 = arith.constant 0 : index
    %0 = vector.load %arg4[%c0, %c0_0] : memref<6x256xf32, #tpu.memory_space<vmem>>, vector<6x256xf32>
    %c0_1 = arith.constant 0 : index
    %c0_2 = arith.constant 0 : index
    %1 = vector.load %arg2[%c0_1, %c0_2] : memref<6x1xf32, #tpu.memory_space<vmem>>, vector<6x1xf32>
    %2 = vector.broadcast %1 : vector<6x1xf32> to vector<6x256xf32>
    %3 = arith.mulf %0, %2 : vector<6x256xf32>
    %c0_3 = arith.constant 0 : index
    %c0_4 = arith.constant 0 : index
    %4 = vector.load %arg3[%c0_3, %c0_4] : memref<6x1xf32, #tpu.memory_space<vmem>>, vector<6x1xf32>
    %5 = vector.broadcast %4 : vector<6x1xf32> to vector<6x256xf32>
    %6 = arith.addf %3, %5 : vector<6x256xf32>
    %c0_5 = arith.constant 0 : index
    %c0_6 = arith.constant 0 : index
    %7 = vector.load %arg5[%c0_5, %c0_6] : memref<6x256xf32, #tpu.memory_space<vmem>>, vector<6x256xf32>
    tpu.vector_store %arg5[%c0_5, %c0_6], %6 {strides = array<i32>} : memref<6x256xf32, #tpu.memory_space<vmem>>, vector<6x256xf32>,
    return
  }
  func.func @transform_0(%arg0: i32, %arg1: i32) -> (i32, i32) {
    %c0_i32 = arith.constant 0 : i32
    %c0_i32_0 = arith.constant 0 : i32
    return %arg0, %c0_i32 : i32, i32
  }
  func.func @transform_1(%arg0: i32, %arg1: i32) -> (i32, i32) {
    %c0_i32 = arith.constant 0 : i32
    %c0_i32_0 = arith.constant 0 : i32
    return %arg0, %c0_i32 : i32, i32
  }
  func.func @transform_2(%arg0: i32, %arg1: i32) -> (i32, i32) {
    %c0_i32 = arith.constant 0 : i32
    return %arg0, %arg1 : i32, i32
  }
  func.func @transform_3(%arg0: i32, %arg1: i32) -> (i32, i32) {
    %c0_i32 = arith.constant 0 : i32
    return %arg0, %arg1 : i32, i32
  }
}

</mosaic_0001>

<llo_original>
// kernel: tpu_custom_call.1
$region0: #{tpu_custom_call.1}
  #allocation0 [shape = 'u32[]', space=smem, size = 0x4, offset = 0x4, fixed_abs, tag = 'smem constant byte address 0x4 - core index']
  #allocation1 [shape = 'u32[144,128]{1,0:T(1,128)}', space=vmem, size = 0x12000, scoped, tag = 'internal scratch']
  %s0 = inlined_call_operand.vmem [shape: f32[6,1], index: 0, kind: input, shape index: {}]
  %s1 = inlined_call_operand.vmem [shape: f32[6,1], index: 1, kind: input, shape index: {}]
  %s2 = inlined_call_operand.vmem [shape: f32[6,256], index: 2, kind: input, shape index: {}]
  %s3 = inlined_call_operand.hbm [shape: f32[6,256], index: 3, kind: output, shape index: {}]
  %s4 = sld [smem:[#allocation0]]
  $region22: #{tpu_custom_call.1} parent=0
    _
  %s6 = ssub.s32 1, %s4
  %s7 = scalar_select 0, %s6, %s4
  $region1: #{tpu_custom_call.1} parent=0
    #allocation2 [shape = 'u8[8192]{0}', space=vmem, size = 0x2000, scoped, tag = 'output window, operand 0, single buffered']
    #allocation3 [shape = 's32[1]{0}', space=sflag, size = 0x4, scoped, tag = 'scoped memory for tpu_custom_call.1']
    %8 = vsyncpa [#allocation3], 0
    // Predicated region
    $region2: #{tpu_custom_call.1} parent=1 // pred_check
      _
    $region3: #{tpu_custom_call.1} parent=1 // pred_check_branch
      %10 = sbr.rel (0) target = $region5
    $region4: #{tpu_custom_call.1} parent=1 // pred_region
      _
    $region5: #{tpu_custom_call.1} parent=1 // pred_fallthru
      _
    // Predicated region
    $region6: #{tpu_custom_call.1} parent=1 // pred_check
      _
    $region7: #{tpu_custom_call.1} parent=1 // pred_check_branch
      %12 = sbr.rel (0) target = $region9
    $region8: #{tpu_custom_call.1} parent=1 // pred_region
      _
    $region9: #{tpu_custom_call.1} parent=1 // pred_fallthru
      _
    // Predicated region
    $region10: #{tpu_custom_call.1} parent=1 // pred_check
      _
    $region11: #{tpu_custom_call.1} parent=1 // pred_check_branch
      %14 = sbr.rel (0) target = $region13
    $region12: #{tpu_custom_call.1} parent=1 // pred_region
      _
    $region13: #{tpu_custom_call.1} parent=1 // pred_fallthru
      _
    %v15 = vld [vmem:[%s2] sm:$0x3f]
    %v16 = vld [vmem:[%s2 + $0x8] sm:$0x3f]
    %v17 = vld [vmem:[%s0] sm:$0x3f]
    %19 = vset.pattern.permute.xlu0 0
    %20 = vperm.xlu0 %19, %v17
    %v21 = vpop.permute.xlu0 %20
    %v23 = vmul.f32 %v15, %v21
    %v24 = vmul.f32 %v16, %v21
    %v25 = vld [vmem:[%s1] sm:$0x3f]
    %27 = vset.pattern.permute.xlu0 0
    %28 = vperm.xlu0 %27, %v25
    %v29 = vpop.permute.xlu0 %28
    %v31 = vadd.f32 %v23, %v29
    %v32 = vadd.f32 %v24, %v29
    %33 = vst [vmem:[#allocation2] sm:$0x3f] %v31
    %34 = vst [vmem:[#allocation2 + $0x8] sm:$0x3f] %v32
    // Predicated region
    $region14: #{tpu_custom_call.1} parent=1 // pred_check
      _
    $region15: #{tpu_custom_call.1} parent=1 // pred_check_branch
      %36 = sbr.rel (0) target = $region17
    $region16: #{tpu_custom_call.1} parent=1 // pred_region
      %s38 = ssub.s32 256, 256
      %39 = vsyncadd [#allocation3], %s38
      %s41 = sshll.u32 [#allocation2], 4
      %s42 = int_to_ptr.vmem [resolvable:$true] %s41
      %44 = dma.vmem_to_hbm [thread:$0]  %s42, 256, %s3, [#allocation3]
    $region17: #{tpu_custom_call.1} parent=1 // pred_fallthru
      _
    // Predicated region
    $region18: #{tpu_custom_call.1} parent=1 // pred_check
      _
    $region19: #{tpu_custom_call.1} parent=1 // pred_check_branch
      %46 = sbr.rel (0) target = $region21
    $region20: #{tpu_custom_call.1} parent=1 // pred_region
      %47 = dma.done [#allocation3], 256
    $region21: #{tpu_custom_call.1} parent=1 // pred_fallthru
      _
    %48 = vsyncpa [#allocation3], 1

</llo_original>
